<compile_context>
chip_gen: v7x
topology: tpu7x:2x2x1
jax: 0.10.0
libtpu: 0.0.40
codegen_flags: <defaults>
</compile_context>

<pallas_src>
import functools

import jax
import jax.numpy as jnp
from jax.experimental import pallas as pl
from jax.experimental.pallas import tpu as pltpu

EPS = 1e-8
LANE = 128
SUBLANE = 8
_TARGET_BLOCK_BYTES = 2 << 20  # ~2 MiB per tile per pipeline buffer


def _round_up(x, m):
    return ((x + m - 1) // m) * m


def _round_down(x, m):
    return (x // m) * m


def _adain_kernel(c_ref, s_ref, o_ref, *, hw):
    # c_ref / s_ref / o_ref: (block_rows, hw_pad) tiles in VMEM.
    c = c_ref[...].astype(jnp.float32)
    s = s_ref[...].astype(jnp.float32)
    hw_pad = c.shape[-1]

    inv_hw = jnp.float32(1.0 / hw)
    # TODO(synk): H*W == 1 has undefined unbiased variance (PyTorch returns NaN);
    # we guard the divisor to avoid Inf/NaN propagation.
    inv_hw_m1 = jnp.float32(1.0 / max(hw - 1, 1))

    # Padding columns are zero in the wrapper, so plain sums give the correct
    # mean; the centered terms need an explicit mask for the variance.
    mean_c = jnp.sum(c, axis=-1, keepdims=True) * inv_hw
    mean_s = jnp.sum(s, axis=-1, keepdims=True) * inv_hw

    dc = c - mean_c
    ds = s - mean_s
    if hw_pad != hw:
        col = jax.lax.broadcasted_iota(jnp.int32, c.shape, dimension=1)
        valid = col < hw
        dc = jnp.where(valid, dc, 0.0)
        ds = jnp.where(valid, ds, 0.0)

    var_c = jnp.sum(dc * dc, axis=-1, keepdims=True) * inv_hw_m1 + EPS
    var_s = jnp.sum(ds * ds, axis=-1, keepdims=True) * inv_hw_m1 + EPS

    # ratio = std_s / std_c  (rsqrt goes to the EUP slot); fold the affine so
    # the per-element work is a single mul + add.
    ratio = jnp.sqrt(var_s) * jax.lax.rsqrt(var_c)
    shift = mean_s - mean_c * ratio
    o_ref[...] = (c * ratio + shift).astype(o_ref.dtype)


def adain(features_content, features_style):
    assert features_content.shape[:2] == features_style.shape[:2], (
        "make sure the features have the same shape, get {} and {}".format(
            features_content.shape, features_style.shape
        )
    )
    n, c, h, w = features_content.shape
    nc = n * c
    hw = h * w
    dtype = features_content.dtype

    # Lane-dense last dim: pad H*W up to a multiple of 128.
    hw_pad = _round_up(hw, LANE)

    # Pick block_rows from the tile budget (amortize per-step overhead),
    # rounded to the sublane quantum, then clamp to the (padded) row count.
    row_bytes = hw_pad * 4  # budget with f32 compute width
    block_rows = max(SUBLANE, _round_down(_TARGET_BLOCK_BYTES // row_bytes, SUBLANE))
    block_rows = min(block_rows, _round_up(nc, SUBLANE))
    # Keep >= 2 grid steps when there is enough work so v7x's two TensorCores
    # both get rows (no-op on single-TC v5e/v6e).
    if nc >= 2 * SUBLANE and block_rows >= nc:
        block_rows = _round_up(pl.cdiv(nc, 2), SUBLANE)

    nc_pad = _round_up(nc, block_rows)
    grid = (nc_pad // block_rows,)

    content2d = features_content.reshape(nc, hw)
    style2d = features_style.reshape(nc, hw)
    if nc_pad != nc or hw_pad != hw:
        pad = ((0, nc_pad - nc), (0, hw_pad - hw))
        content2d = jnp.pad(content2d, pad)
        style2d = jnp.pad(style2d, pad)

    # 3 arrays (content, style, out) x 2 pipeline buffers, plus headroom.
    working_set = 3 * 2 * block_rows * hw_pad * 4
    vmem_limit = int(min(max(32 << 20, 2 * working_set), 48 << 20))

    out2d = pl.pallas_call(
        functools.partial(_adain_kernel, hw=hw),
        out_shape=jax.ShapeDtypeStruct((nc_pad, hw_pad), dtype),
        grid=grid,
        in_specs=[
            pl.BlockSpec((block_rows, hw_pad), lambda i: (i, 0)),
            pl.BlockSpec((block_rows, hw_pad), lambda i: (i, 0)),
        ],
        out_specs=pl.BlockSpec((block_rows, hw_pad), lambda i: (i, 0)),
        compiler_params=pltpu.CompilerParams(
            dimension_semantics=("parallel",),
            vmem_limit_bytes=vmem_limit,
        ),
    )(content2d, style2d)

    if nc_pad != nc or hw_pad != hw:
        out2d = out2d[:nc, :hw]
    return out2d.reshape(n, c, h, w)


def _adain_reference(fc, fs, eps=EPS):
    n, c, h, w = fc.shape
    fc2 = fc.reshape(n, c, -1)
    fs2 = fs.reshape(n, c, -1)
    var_c = jnp.var(fc2, axis=2, ddof=1) + eps
    var_s = jnp.var(fs2, axis=2, ddof=1) + eps
    std_c = jnp.sqrt(var_c)[:, :, None, None]
    std_s = jnp.sqrt(var_s)[:, :, None, None]
    mean_c = jnp.mean(fc2, axis=2)[:, :, None, None]
    mean_s = jnp.mean(fs2, axis=2)[:, :, None, None]
    return (fc - mean_c) / std_c * std_s + mean_s


if __name__ == "__main__":
    key = jax.random.PRNGKey(0)
    k1, k2 = jax.random.split(key)
    # NCHW: batch=2, channels=4, spatial=16x16
    features_content = jax.random.normal(k1, (2, 4, 16, 16), dtype=jnp.float32)
    features_style = 2.0 * jax.random.normal(k2, (2, 4, 16, 16), dtype=jnp.float32) + 0.5

    out = adain(features_content, features_style)
    out = jax.block_until_ready(out)

    ref = _adain_reference(features_content, features_style)
    assert out.shape == features_content.shape
    assert jnp.allclose(out, ref, atol=1e-4, rtol=1e-4), "mismatch vs reference"

    # Extra coverage: non-128-multiple H*W and N*C not a multiple of the tile.
    k3, k4 = jax.random.split(k1)
    fc2 = jax.random.normal(k3, (3, 5, 14, 14), dtype=jnp.float32)
    fs2 = jax.random.normal(k4, (3, 5, 14, 14), dtype=jnp.float32) * 1.5 - 0.3
    out2 = jax.block_until_ready(adain(fc2, fs2))
    ref2 = _adain_reference(fc2, fs2)
    assert jnp.allclose(out2, ref2, atol=1e-4, rtol=1e-4), "mismatch (unaligned shape)"

    print("KERNEL_OK")
</pallas_src>

<mosaic_0001>
module attributes {stable_mosaic.version = 11 : i64} {
  func.func @_adain_kernel(%arg0: i32, %arg1: memref<8x256xf32, #tpu.memory_space<vmem>>, %arg2: memref<8x256xf32, #tpu.memory_space<vmem>>, %arg3: memref<8x256xf32, #tpu.memory_space<vmem>>) attributes {dimension_semantics = [#tpu.dimension_semantics<parallel>], iteration_bounds = array<i64: 1>, scalar_prefetch = 0 : i64, scratch_operands = 0 : i64, tpu.core_type = #tpu.core_type<tc>, window_params = [{transform_indices = @transform_0, window_bounds = array<i64: 8, 256>}, {transform_indices = @transform_1, window_bounds = array<i64: 8, 256>}, {transform_indices = @transform_2, window_bounds = array<i64: 8, 256>}]} {
    %c0 = arith.constant 0 : index
    %c0_0 = arith.constant 0 : index
    %0 = vector.load %arg1[%c0, %c0_0] : memref<8x256xf32, #tpu.memory_space<vmem>>, vector<8x256xf32>
    %c0_1 = arith.constant 0 : index
    %c0_2 = arith.constant 0 : index
    %1 = vector.load %arg2[%c0_1, %c0_2] : memref<8x256xf32, #tpu.memory_space<vmem>>, vector<8x256xf32>
    %cst = arith.constant dense<0.000000e+00> : vector<8xf32>
    %2 = vector.multi_reduction <add>, %0, %cst [1] : vector<8x256xf32> to vector<8xf32>
    %3 = vector.shape_cast %2 : vector<8xf32> to vector<8x1xf32>
    %cst_3 = arith.constant 3.906250e-03 : f32
    %4 = vector.broadcast %cst_3 : f32 to vector<8x1xf32>
    %5 = arith.mulf %3, %4 : vector<8x1xf32>
    %cst_4 = arith.constant dense<0.000000e+00> : vector<8xf32>
    %6 = vector.multi_reduction <add>, %1, %cst_4 [1] : vector<8x256xf32> to vector<8xf32>
    %7 = vector.shape_cast %6 : vector<8xf32> to vector<8x1xf32>
    %cst_5 = arith.constant 3.906250e-03 : f32
    %8 = vector.broadcast %cst_5 : f32 to vector<8x1xf32>
    %9 = arith.mulf %7, %8 : vector<8x1xf32>
    %10 = vector.broadcast %5 : vector<8x1xf32> to vector<8x256xf32>
    %11 = arith.subf %0, %10 : vector<8x256xf32>
    %12 = vector.broadcast %9 : vector<8x1xf32> to vector<8x256xf32>
    %13 = arith.subf %1, %12 : vector<8x256xf32>
    %14 = arith.mulf %11, %11 : vector<8x256xf32>
    %cst_6 = arith.constant dense<0.000000e+00> : vector<8xf32>
    %15 = vector.multi_reduction <add>, %14, %cst_6 [1] : vector<8x256xf32> to vector<8xf32>
    %16 = vector.shape_cast %15 : vector<8xf32> to vector<8x1xf32>
    %cst_7 = arith.constant 0.00392156886 : f32
    %17 = vector.broadcast %cst_7 : f32 to vector<8x1xf32>
    %18 = arith.mulf %16, %17 : vector<8x1xf32>
    %cst_8 = arith.constant 9.99999993E-9 : f32
    %19 = vector.broadcast %cst_8 : f32 to vector<8x1xf32>
    %20 = arith.addf %18, %19 : vector<8x1xf32>
    %21 = arith.mulf %13, %13 : vector<8x256xf32>
    %cst_9 = arith.constant dense<0.000000e+00> : vector<8xf32>
    %22 = vector.multi_reduction <add>, %21, %cst_9 [1] : vector<8x256xf32> to vector<8xf32>
    %23 = vector.shape_cast %22 : vector<8xf32> to vector<8x1xf32>
    %cst_10 = arith.constant 0.00392156886 : f32
    %24 = vector.broadcast %cst_10 : f32 to vector<8x1xf32>
    %25 = arith.mulf %23, %24 : vector<8x1xf32>
    %cst_11 = arith.constant 9.99999993E-9 : f32
    %26 = vector.broadcast %cst_11 : f32 to vector<8x1xf32>
    %27 = arith.addf %25, %26 : vector<8x1xf32>
    %28 = math.sqrt %27 : vector<8x1xf32>
    %29 = math.rsqrt %20 : vector<8x1xf32>
    %30 = arith.mulf %28, %29 : vector<8x1xf32>
    %31 = arith.mulf %5, %30 : vector<8x1xf32>
    %32 = arith.subf %9, %31 : vector<8x1xf32>
    %33 = vector.broadcast %30 : vector<8x1xf32> to vector<8x256xf32>
    %34 = arith.mulf %0, %33 : vector<8x256xf32>
    %35 = vector.broadcast %32 : vector<8x1xf32> to vector<8x256xf32>
    %36 = arith.addf %34, %35 : vector<8x256xf32>
    %c0_12 = arith.constant 0 : index
    %c0_13 = arith.constant 0 : index
    %37 = vector.load %arg3[%c0_12, %c0_13] : memref<8x256xf32, #tpu.memory_space<vmem>>, vector<8x256xf32>
    tpu.vector_store %arg3[%c0_12, %c0_13], %36 {strides = array<i32>} : memref<8x256xf32, #tpu.memory_space<vmem>>, vector<8x256xf32>,
    return
  }
  func.func @transform_0(%arg0: i32) -> (i32, i32) {
    %c0_i32 = arith.constant 0 : i32
    %c0_i32_0 = arith.constant 0 : i32
    return %arg0, %c0_i32 : i32, i32
  }
  func.func @transform_1(%arg0: i32) -> (i32, i32) {
    %c0_i32 = arith.constant 0 : i32
    %c0_i32_0 = arith.constant 0 : i32
    return %arg0, %c0_i32 : i32, i32
  }
  func.func @transform_2(%arg0: i32) -> (i32, i32) {
    %c0_i32 = arith.constant 0 : i32
    %c0_i32_0 = arith.constant 0 : i32
    return %arg0, %c0_i32 : i32, i32
  }
}

</mosaic_0001>

<llo_original>
// kernel: tpu_custom_call.1
$region0: #{tpu_custom_call.1}
  #allocation0 [shape = 'u32[]', space=smem, size = 0x4, offset = 0x4, fixed_abs, tag = 'smem constant byte address 0x4 - core index']
  #allocation1 [shape = 'u32[144,128]{1,0:T(1,128)}', space=vmem, size = 0x12000, scoped, tag = 'internal scratch']
  %s0 = inlined_call_operand.hbm [shape: f32[8,256], index: 0, kind: input, shape index: {}]
  %s1 = inlined_call_operand.hbm [shape: f32[8,256], index: 1, kind: input, shape index: {}]
  %s2 = inlined_call_operand.hbm [shape: f32[8,256], index: 2, kind: output, shape index: {}]
  %s3 = sld [smem:[#allocation0]]
  $region26: #{tpu_custom_call.1} parent=0
    _
  %s5 = ssub.s32 1, %s3
  %s6 = scalar_select 0, %s5, %s3
  $region1: #{tpu_custom_call.1} parent=0
    #allocation2 [shape = 'u8[8192]{0}', space=vmem, size = 0x2000, scoped, tag = 'input window, operand 0, single buffered']
    #allocation3 [shape = 's32[1]{0}', space=sflag, size = 0x4, scoped, tag = 'scoped memory for tpu_custom_call.1']
    #allocation4 [shape = 's32[1]{0}', space=sflag, size = 0x4, scoped, tag = 'scoped memory for tpu_custom_call.1']
    #allocation5 [shape = 'u8[8192]{0}', space=vmem, size = 0x2000, scoped, tag = 'input window, operand 1, single buffered']
    #allocation6 [shape = 's32[1]{0}', space=sflag, size = 0x4, scoped, tag = 'scoped memory for tpu_custom_call.1']
    #allocation7 [shape = 'u8[8192]{0}', space=vmem, size = 0x2000, scoped, tag = 'output window, operand 0, single buffered']
    %7 = vsyncpa [#allocation3], 0
    %8 = vsyncpa [#allocation6], 0
    %9 = vsyncpa [#allocation4], 0
    // Predicated region
    $region2: #{tpu_custom_call.1} parent=1 // pred_check
      _
    $region3: #{tpu_custom_call.1} parent=1 // pred_check_branch
      %11 = sbr.rel (0) target = $region5
    $region4: #{tpu_custom_call.1} parent=1 // pred_region
      %s13 = ssub.s32 256, 256
      %14 = vsyncadd [#allocation3], %s13
      %s16 = sshll.u32 [#allocation2], 4
      %s17 = int_to_ptr.vmem [resolvable:$true] %s16
      %19 = dma.hbm_to_vmem [thread:$0]  %s0, 256, %s17, [#allocation3]
    $region5: #{tpu_custom_call.1} parent=1 // pred_fallthru
      _
    // Predicated region
    $region6: #{tpu_custom_call.1} parent=1 // pred_check
      _
    $region7: #{tpu_custom_call.1} parent=1 // pred_check_branch
      %21 = sbr.rel (0) target = $region9
    $region8: #{tpu_custom_call.1} parent=1 // pred_region
      %s23 = ssub.s32 256, 256
      %24 = vsyncadd [#allocation6], %s23
      %s26 = sshll.u32 [#allocation5], 4
      %s27 = int_to_ptr.vmem [resolvable:$true] %s26
      %29 = dma.hbm_to_vmem [thread:$0]  %s1, 256, %s27, [#allocation6]
    $region9: #{tpu_custom_call.1} parent=1 // pred_fallthru
      _
    // Predicated region
    $region10: #{tpu_custom_call.1} parent=1 // pred_check
      _
    $region11: #{tpu_custom_call.1} parent=1 // pred_check_branch
      %31 = sbr.rel (0) target = $region13
    $region12: #{tpu_custom_call.1} parent=1 // pred_region
      %32 = dma.done [#allocation3], 256
    $region13: #{tpu_custom_call.1} parent=1 // pred_fallthru
      _
    // Predicated region
    $region14: #{tpu_custom_call.1} parent=1 // pred_check
      _
    $region15: #{tpu_custom_call.1} parent=1 // pred_check_branch
      %34 = sbr.rel (0) target = $region17
    $region16: #{tpu_custom_call.1} parent=1 // pred_region
      %35 = dma.done [#allocation6], 256
    $region17: #{tpu_custom_call.1} parent=1 // pred_fallthru
      _
    %v36 = vld [vmem:[#allocation2] sm:$0xff]
    %v37 = vld [vmem:[#allocation2 + $0x8] sm:$0xff]
    %v38 = vld [vmem:[#allocation5] sm:$0xff]
    %v39 = vld [vmem:[#allocation5 + $0x8] sm:$0xff]
    %v40 = vadd.f32 %v36, %v37
    %41 = vadd.xlane.f32.xlu0 %v40
    %v42 = vpop.xlane.xlu0 %41
    %v43 = vmul.f32 %v42, 0.00390625
    %v44 = vadd.f32 %v38, %v39
    %45 = vadd.xlane.f32.xlu0 %v44
    %v46 = vpop.xlane.xlu0 %45
    %v47 = vmul.f32 %v46, 0.00390625
    %v48 = vsub.f32 %v36, %v43
    %v49 = vsub.f32 %v37, %v43
    %v50 = vsub.f32 %v38, %v47
    %v51 = vsub.f32 %v39, %v47
    %v52 = vmul.f32 %v48, %v48
    %v53 = vmul.f32 %v49, %v49
    %v54 = vadd.f32 %v52, %v53
    %55 = vadd.xlane.f32.xlu0 %v54
    %v56 = vpop.xlane.xlu0 %55
    %v57 = vmul.f32 %v56, 0.003921569
    %v58 = vadd.f32 %v57, 1e-08
    %v59 = vmul.f32 %v50, %v50
    %v60 = vmul.f32 %v51, %v51
    %v61 = vadd.f32 %v59, %v60
    %62 = vadd.xlane.f32.xlu0 %v61
    %v63 = vpop.xlane.xlu0 %62
    %v64 = vmul.f32 %v63, 0.003921569
    %v65 = vadd.f32 %v64, 1e-08
    %v66 = vrsqrt.pop %v65
    %v67 = vmul.f32 %v65, %v66
    %vm68 = vcmp.eq.f32.partialorder %v65, inf
    %v69 = vsel %vm68, %v65, %v67
    %vm70 = vcmp.eq.f32.partialorder %v65, 0.0
    %v71 = vand.u32 %v65, 2147483648
    %v72 = vsel %vm70, %v71, %v69
    %v73 = vrsqrt.pop %v58
    %v74 = vmul.f32 %v72, %v73
    %v75 = vmul.f32 %v43, %v74
    %v76 = vsub.f32 %v47, %v75
    %v77 = vmul.f32 %v36, %v74
    %v78 = vmul.f32 %v37, %v74
    %v79 = vadd.f32 %v77, %v76
    %v80 = vadd.f32 %v78, %v76
    %81 = vst [vmem:[#allocation7] sm:$0xff] %v79
    %82 = vst [vmem:[#allocation7 + $0x8] sm:$0xff] %v80
    // Predicated region
    $region18: #{tpu_custom_call.1} parent=1 // pred_check
      _
    $region19: #{tpu_custom_call.1} parent=1 // pred_check_branch
      %84 = sbr.rel (0) target = $region21
    $region20: #{tpu_custom_call.1} parent=1 // pred_region
      %s86 = ssub.s32 256, 256
      %87 = vsyncadd [#allocation4], %s86
      %s89 = sshll.u32 [#allocation7], 4
      %s90 = int_to_ptr.vmem [resolvable:$true] %s89
      %92 = dma.vmem_to_hbm [thread:$0]  %s90, 256, %s2, [#allocation4]
    $region21: #{tpu_custom_call.1} parent=1 // pred_fallthru
      _
    // Predicated region
    $region22: #{tpu_custom_call.1} parent=1 // pred_check
      _
    $region23: #{tpu_custom_call.1} parent=1 // pred_check_branch
      %94 = sbr.rel (0) target = $region25
    $region24: #{tpu_custom_call.1} parent=1 // pred_region
      %95 = dma.done [#allocation4], 256
    $region25: #{tpu_custom_call.1} parent=1 // pred_fallthru
      _
    %96 = vsyncpa [#allocation3], 1
    %97 = vsyncpa [#allocation6], 1
    %98 = vsyncpa [#allocation4], 1

</llo_original>
